<compile_context>
chip_gen: v7x
topology: tpu7x:2x2x1
jax: 0.10.0
libtpu: 0.0.40
codegen_flags: <defaults>
</compile_context>

<pallas_src>
import functools

import jax
import jax.numpy as jnp
from jax.experimental import pallas as pl
from jax.experimental.pallas import tpu as pltpu

_BN_EPS = 1e-5  # nn.BatchNorm2d default


# ----------------------------------------------------------------------------
# Fused Conv2d((K,1), dilation, 'same') + bias + BatchNorm(eval) + activation
# ----------------------------------------------------------------------------
def _make_mse_kernel(H, W, KH, Cin, Cout, dilation, activation):
    HW = H * W

    def kernel(x_ref, w_ref, scale_ref, shift_ref, o_ref):
        # x_ref:     (1, Cin, Hp*W)  H-padded, spatially-flattened input
        # w_ref:     (Cout, KH*Cin)  conv weights, index = kh*Cin + ci
        # scale_ref: (Cout, 1)       folded BN scale
        # shift_ref: (Cout, 1)       folded conv-bias + BN shift
        # o_ref:     (1, Cout, H*W)  lane-dense output block
        x_full = x_ref[0]            # (Cin, Hp*W)
        wmat = w_ref[...]            # (Cout, KH*Cin)

        acc = jnp.zeros((Cout, HW), jnp.float32)
        # VPU multiply-accumulate: one (Cout,1) x (1,HW) outer product per tap.
        for kh in range(KH):                      # unrolled: KH*Cin taps total
            start = kh * dilation * W
            xs = x_full[:, start:start + HW]      # (Cin, HW) shifted tap slice
            for ci in range(Cin):
                idx = kh * Cin + ci
                acc = acc + wmat[:, idx:idx + 1] * xs[ci:ci + 1, :]

        # Fused conv-bias + inference BatchNorm, then activation.
        acc = acc * scale_ref[...] + shift_ref[...]
        if activation == "relu":
            acc = jnp.maximum(acc, 0.0)
        o_ref[0] = acc.astype(o_ref.dtype)

    return kernel


@functools.partial(jax.jit, static_argnames=("dilation", "activation"))
def mse_forward(x_nchw, w, b, gamma, beta, running_mean, running_var,
                *, dilation=1, activation="relu"):
    """MSE block forward. x_nchw: (N, Cin, H, W) f32; w: (Cout, Cin, KH, 1)
    in PyTorch OIHW layout; b/gamma/beta/running_mean/running_var: (Cout,)."""
    N, Cin, H, W = x_nchw.shape
    Cout, Cin_w, KH, KW = w.shape
    assert Cin_w == Cin and KW == 1
    assert KH % 2 == 1, "padding='same' implemented for odd kernel_size only"

    pad = dilation * (KH - 1) // 2
    Hp = H + 2 * pad

    # Pad along H once (kernel width is 1 -> no W pad), flatten spatial dims so
    # the kernel's minor dimension is H*W (lane-dense, multiple of 128 here).
    xp = jnp.pad(x_nchw, ((0, 0), (0, 0), (pad, pad), (0, 0)))
    xp = xp.reshape(N, Cin, Hp * W)

    # Fold conv bias + inference BatchNorm into per-channel scale / shift.
    scale = gamma * jax.lax.rsqrt(running_var + _BN_EPS)      # (Cout,)
    shift = (b - running_mean) * scale + beta                 # (Cout,)

    # Weights (Cout, Cin, KH, 1) -> (Cout, KH*Cin) with index kh*Cin + ci.
    w_flat = jnp.transpose(w[..., 0], (0, 2, 1)).reshape(Cout, KH * Cin)

    kernel = _make_mse_kernel(H, W, KH, Cin, Cout, dilation, activation)
    out_flat = pl.pallas_call(
        kernel,
        out_shape=jax.ShapeDtypeStruct((N, Cout, H * W), x_nchw.dtype),
        grid=(N,),
        in_specs=[
            pl.BlockSpec((1, Cin, Hp * W), lambda n: (n, 0, 0)),
            pl.BlockSpec((Cout, KH * Cin), lambda n: (0, 0)),
            pl.BlockSpec((Cout, 1), lambda n: (0, 0)),
            pl.BlockSpec((Cout, 1), lambda n: (0, 0)),
        ],
        out_specs=pl.BlockSpec((1, Cout, H * W), lambda n: (n, 0, 0)),
        compiler_params=pltpu.CompilerParams(
            dimension_semantics=("parallel",)),
    )(xp, w_flat, scale.reshape(Cout, 1), shift.reshape(Cout, 1))

    return out_flat.reshape(N, Cout, H, W)


if __name__ == "__main__":
    # Small config consistent with the module.
    N, in_channels, H, W = 2, 4, 16, 16
    filters = 8
    kernel_size = 3
    dilation = 1            # dilation_sizes=None -> 1
    activation = "relu"

    key = jax.random.PRNGKey(0)
    kx, kw, kb, kg, kbe, km, kv = jax.random.split(key, 7)
    x = jax.random.normal(kx, (N, in_channels, H, W), jnp.float32)
    w = 0.1 * jax.random.normal(
        kw, (filters, in_channels, kernel_size, 1), jnp.float32)
    b = 0.1 * jax.random.normal(kb, (filters,), jnp.float32)
    gamma = 1.0 + 0.1 * jax.random.normal(kg, (filters,), jnp.float32)
    beta = 0.1 * jax.random.normal(kbe, (filters,), jnp.float32)
    rmean = 0.1 * jax.random.normal(km, (filters,), jnp.float32)
    rvar = 1.0 + 0.1 * jax.random.uniform(kv, (filters,), jnp.float32)

    out = mse_forward(x, w, b, gamma, beta, rmean, rvar,
                      dilation=dilation, activation=activation)
    out = jax.block_until_ready(out)

    assert out.shape == (N, filters, H, W), out.shape
    assert jnp.isfinite(out).all()

    # Plain-JAX reference (non-negotiable correctness check).
    pad = dilation * (kernel_size - 1) // 2
    ref = jax.lax.conv_general_dilated(
        x, w, window_strides=(1, 1), padding=((pad, pad), (0, 0)),
        rhs_dilation=(dilation, 1),
        dimension_numbers=("NCHW", "OIHW", "NCHW"),
        precision=jax.lax.Precision.HIGHEST)
    ref = ref + b[None, :, None, None]
    ref = (ref - rmean[None, :, None, None]) * \
          (gamma * jax.lax.rsqrt(rvar + _BN_EPS))[None, :, None, None] + \
          beta[None, :, None, None]
    ref = jnp.maximum(ref, 0.0)
    assert bool(jnp.allclose(out, ref, atol=1e-4, rtol=1e-4)), \
        "mismatch vs plain-JAX reference"

    print("KERNEL_OK")
</pallas_src>

<mosaic_0001>
module attributes {stable_mosaic.version = 11 : i64} {
  func.func @kernel(%arg0: i32, %arg1: memref<1x4x288xf32, #tpu.memory_space<vmem>>, %arg2: memref<8x12xf32, #tpu.memory_space<vmem>>, %arg3: memref<8x1xf32, #tpu.memory_space<vmem>>, %arg4: memref<8x1xf32, #tpu.memory_space<vmem>>, %arg5: memref<1x8x256xf32, #tpu.memory_space<vmem>>) attributes {dimension_semantics = [#tpu.dimension_semantics<parallel>], iteration_bounds = array<i64: 2>, scalar_prefetch = 0 : i64, scratch_operands = 0 : i64, tpu.core_type = #tpu.core_type<tc>, window_params = [{transform_indices = @transform_0, window_bounds = array<i64: 1, 4, 288>}, {pipeline_mode = #tpu.pipeline_mode<synchronous>, transform_indices = @transform_1, window_bounds = array<i64: 8, 12>}, {pipeline_mode = #tpu.pipeline_mode<synchronous>, transform_indices = @transform_2, window_bounds = array<i64: 8, 1>}, {pipeline_mode = #tpu.pipeline_mode<synchronous>, transform_indices = @transform_3, window_bounds = array<i64: 8, 1>}, {transform_indices = @transform_4, window_bounds = array<i64: 1, 8, 256>}]} {
    %c0 = arith.constant 0 : index
    %c0_0 = arith.constant 0 : index
    %c0_1 = arith.constant 0 : index
    %0 = vector.load %arg1[%c0, %c0_0, %c0_1] : memref<1x4x288xf32, #tpu.memory_space<vmem>>, vector<1x4x288xf32>
    %1 = vector.shape_cast %0 : vector<1x4x288xf32> to vector<4x288xf32>
    %c0_2 = arith.constant 0 : index
    %c0_3 = arith.constant 0 : index
    %2 = vector.load %arg2[%c0_2, %c0_3] : memref<8x12xf32, #tpu.memory_space<vmem>>, vector<8x12xf32>
    %cst = arith.constant 0.000000e+00 : f32
    %3 = vector.broadcast %cst : f32 to vector<8x256xf32>
    %4 = vector.extract_strided_slice %1 {offsets = [0, 0], sizes = [4, 256], strides = [1, 1]} : vector<4x288xf32> to vector<4x256xf32>
    %5 = vector.extract_strided_slice %2 {offsets = [0, 0], sizes = [8, 1], strides = [1, 1]} : vector<8x12xf32> to vector<8x1xf32>
    %6 = vector.extract_strided_slice %4 {offsets = [0, 0], sizes = [1, 256], strides = [1, 1]} : vector<4x256xf32> to vector<1x256xf32>
    %7 = vector.broadcast %5 : vector<8x1xf32> to vector<8x256xf32>
    %8 = vector.broadcast %6 : vector<1x256xf32> to vector<8x256xf32>
    %9 = arith.mulf %7, %8 : vector<8x256xf32>
    %10 = arith.addf %3, %9 : vector<8x256xf32>
    %11 = vector.extract_strided_slice %2 {offsets = [0, 1], sizes = [8, 1], strides = [1, 1]} : vector<8x12xf32> to vector<8x1xf32>
    %12 = vector.extract_strided_slice %4 {offsets = [1, 0], sizes = [1, 256], strides = [1, 1]} : vector<4x256xf32> to vector<1x256xf32>
    %13 = vector.broadcast %11 : vector<8x1xf32> to vector<8x256xf32>
    %14 = vector.broadcast %12 : vector<1x256xf32> to vector<8x256xf32>
    %15 = arith.mulf %13, %14 : vector<8x256xf32>
    %16 = arith.addf %10, %15 : vector<8x256xf32>
    %17 = vector.extract_strided_slice %2 {offsets = [0, 2], sizes = [8, 1], strides = [1, 1]} : vector<8x12xf32> to vector<8x1xf32>
    %18 = vector.extract_strided_slice %4 {offsets = [2, 0], sizes = [1, 256], strides = [1, 1]} : vector<4x256xf32> to vector<1x256xf32>
    %19 = vector.broadcast %17 : vector<8x1xf32> to vector<8x256xf32>
    %20 = vector.broadcast %18 : vector<1x256xf32> to vector<8x256xf32>
    %21 = arith.mulf %19, %20 : vector<8x256xf32>
    %22 = arith.addf %16, %21 : vector<8x256xf32>
    %23 = vector.extract_strided_slice %2 {offsets = [0, 3], sizes = [8, 1], strides = [1, 1]} : vector<8x12xf32> to vector<8x1xf32>
    %24 = vector.extract_strided_slice %4 {offsets = [3, 0], sizes = [1, 256], strides = [1, 1]} : vector<4x256xf32> to vector<1x256xf32>
    %25 = vector.broadcast %23 : vector<8x1xf32> to vector<8x256xf32>
    %26 = vector.broadcast %24 : vector<1x256xf32> to vector<8x256xf32>
    %27 = arith.mulf %25, %26 : vector<8x256xf32>
    %28 = arith.addf %22, %27 : vector<8x256xf32>
    %29 = vector.extract_strided_slice %1 {offsets = [0, 16], sizes = [4, 256], strides = [1, 1]} : vector<4x288xf32> to vector<4x256xf32>
    %30 = vector.extract_strided_slice %2 {offsets = [0, 4], sizes = [8, 1], strides = [1, 1]} : vector<8x12xf32> to vector<8x1xf32>
    %31 = vector.extract_strided_slice %29 {offsets = [0, 0], sizes = [1, 256], strides = [1, 1]} : vector<4x256xf32> to vector<1x256xf32>
    %32 = vector.broadcast %30 : vector<8x1xf32> to vector<8x256xf32>
    %33 = vector.broadcast %31 : vector<1x256xf32> to vector<8x256xf32>
    %34 = arith.mulf %32, %33 : vector<8x256xf32>
    %35 = arith.addf %28, %34 : vector<8x256xf32>
    %36 = vector.extract_strided_slice %2 {offsets = [0, 5], sizes = [8, 1], strides = [1, 1]} : vector<8x12xf32> to vector<8x1xf32>
    %37 = vector.extract_strided_slice %29 {offsets = [1, 0], sizes = [1, 256], strides = [1, 1]} : vector<4x256xf32> to vector<1x256xf32>
    %38 = vector.broadcast %36 : vector<8x1xf32> to vector<8x256xf32>
    %39 = vector.broadcast %37 : vector<1x256xf32> to vector<8x256xf32>
    %40 = arith.mulf %38, %39 : vector<8x256xf32>
    %41 = arith.addf %35, %40 : vector<8x256xf32>
    %42 = vector.extract_strided_slice %2 {offsets = [0, 6], sizes = [8, 1], strides = [1, 1]} : vector<8x12xf32> to vector<8x1xf32>
    %43 = vector.extract_strided_slice %29 {offsets = [2, 0], sizes = [1, 256], strides = [1, 1]} : vector<4x256xf32> to vector<1x256xf32>
    %44 = vector.broadcast %42 : vector<8x1xf32> to vector<8x256xf32>
    %45 = vector.broadcast %43 : vector<1x256xf32> to vector<8x256xf32>
    %46 = arith.mulf %44, %45 : vector<8x256xf32>
    %47 = arith.addf %41, %46 : vector<8x256xf32>
    %48 = vector.extract_strided_slice %2 {offsets = [0, 7], sizes = [8, 1], strides = [1, 1]} : vector<8x12xf32> to vector<8x1xf32>
    %49 = vector.extract_strided_slice %29 {offsets = [3, 0], sizes = [1, 256], strides = [1, 1]} : vector<4x256xf32> to vector<1x256xf32>
    %50 = vector.broadcast %48 : vector<8x1xf32> to vector<8x256xf32>
    %51 = vector.broadcast %49 : vector<1x256xf32> to vector<8x256xf32>
    %52 = arith.mulf %50, %51 : vector<8x256xf32>
    %53 = arith.addf %47, %52 : vector<8x256xf32>
    %54 = vector.extract_strided_slice %1 {offsets = [0, 32], sizes = [4, 256], strides = [1, 1]} : vector<4x288xf32> to vector<4x256xf32>
    %55 = vector.extract_strided_slice %2 {offsets = [0, 8], sizes = [8, 1], strides = [1, 1]} : vector<8x12xf32> to vector<8x1xf32>
    %56 = vector.extract_strided_slice %54 {offsets = [0, 0], sizes = [1, 256], strides = [1, 1]} : vector<4x256xf32> to vector<1x256xf32>
    %57 = vector.broadcast %55 : vector<8x1xf32> to vector<8x256xf32>
    %58 = vector.broadcast %56 : vector<1x256xf32> to vector<8x256xf32>
    %59 = arith.mulf %57, %58 : vector<8x256xf32>
    %60 = arith.addf %53, %59 : vector<8x256xf32>
    %61 = vector.extract_strided_slice %2 {offsets = [0, 9], sizes = [8, 1], strides = [1, 1]} : vector<8x12xf32> to vector<8x1xf32>
    %62 = vector.extract_strided_slice %54 {offsets = [1, 0], sizes = [1, 256], strides = [1, 1]} : vector<4x256xf32> to vector<1x256xf32>
    %63 = vector.broadcast %61 : vector<8x1xf32> to vector<8x256xf32>
    %64 = vector.broadcast %62 : vector<1x256xf32> to vector<8x256xf32>
    %65 = arith.mulf %63, %64 : vector<8x256xf32>
    %66 = arith.addf %60, %65 : vector<8x256xf32>
    %67 = vector.extract_strided_slice %2 {offsets = [0, 10], sizes = [8, 1], strides = [1, 1]} : vector<8x12xf32> to vector<8x1xf32>
    %68 = vector.extract_strided_slice %54 {offsets = [2, 0], sizes = [1, 256], strides = [1, 1]} : vector<4x256xf32> to vector<1x256xf32>
    %69 = vector.broadcast %67 : vector<8x1xf32> to vector<8x256xf32>
    %70 = vector.broadcast %68 : vector<1x256xf32> to vector<8x256xf32>
    %71 = arith.mulf %69, %70 : vector<8x256xf32>
    %72 = arith.addf %66, %71 : vector<8x256xf32>
    %73 = vector.extract_strided_slice %2 {offsets = [0, 11], sizes = [8, 1], strides = [1, 1]} : vector<8x12xf32> to vector<8x1xf32>
    %74 = vector.extract_strided_slice %54 {offsets = [3, 0], sizes = [1, 256], strides = [1, 1]} : vector<4x256xf32> to vector<1x256xf32>
    %75 = vector.broadcast %73 : vector<8x1xf32> to vector<8x256xf32>
    %76 = vector.broadcast %74 : vector<1x256xf32> to vector<8x256xf32>
    %77 = arith.mulf %75, %76 : vector<8x256xf32>
    %78 = arith.addf %72, %77 : vector<8x256xf32>
    %c0_4 = arith.constant 0 : index
    %c0_5 = arith.constant 0 : index
    %79 = vector.load %arg3[%c0_4, %c0_5] : memref<8x1xf32, #tpu.memory_space<vmem>>, vector<8x1xf32>
    %80 = vector.broadcast %79 : vector<8x1xf32> to vector<8x256xf32>
    %81 = arith.mulf %78, %80 : vector<8x256xf32>
    %c0_6 = arith.constant 0 : index
    %c0_7 = arith.constant 0 : index
    %82 = vector.load %arg4[%c0_6, %c0_7] : memref<8x1xf32, #tpu.memory_space<vmem>>, vector<8x1xf32>
    %83 = vector.broadcast %82 : vector<8x1xf32> to vector<8x256xf32>
    %84 = arith.addf %81, %83 : vector<8x256xf32>
    %cst_8 = arith.constant 0.000000e+00 : f32
    %85 = vector.broadcast %cst_8 : f32 to vector<8x256xf32>
    %86 = arith.maximumf %84, %85 : vector<8x256xf32>
    %c0_9 = arith.constant 0 : index
    %c0_10 = arith.constant 0 : index
    %c0_11 = arith.constant 0 : index
    %87 = vector.load %arg5[%c0_9, %c0_10, %c0_11] : memref<1x8x256xf32, #tpu.memory_space<vmem>>, vector<1x8x256xf32>
    %88 = vector.shape_cast %87 : vector<1x8x256xf32> to vector<8x256xf32>
    %89 = vector.shape_cast %86 : vector<8x256xf32> to vector<1x8x256xf32>
    tpu.vector_store %arg5[%c0_9, %c0_10, %c0_11], %89 {strides = array<i32>} : memref<1x8x256xf32, #tpu.memory_space<vmem>>, vector<1x8x256xf32>,
    return
  }
  func.func @transform_0(%arg0: i32) -> (i32, i32, i32) {
    %c0_i32 = arith.constant 0 : i32
    %c0_i32_0 = arith.constant 0 : i32
    %c0_i32_1 = arith.constant 0 : i32
    return %arg0, %c0_i32, %c0_i32_0 : i32, i32, i32
  }
  func.func @transform_1(%arg0: i32) -> (i32, i32) {
    %c0_i32 = arith.constant 0 : i32
    %c0_i32_0 = arith.constant 0 : i32
    %c0_i32_1 = arith.constant 0 : i32
    return %c0_i32, %c0_i32_0 : i32, i32
  }
  func.func @transform_2(%arg0: i32) -> (i32, i32) {
    %c0_i32 = arith.constant 0 : i32
    %c0_i32_0 = arith.constant 0 : i32
    %c0_i32_1 = arith.constant 0 : i32
    return %c0_i32, %c0_i32_0 : i32, i32
  }
  func.func @transform_3(%arg0: i32) -> (i32, i32) {
    %c0_i32 = arith.constant 0 : i32
    %c0_i32_0 = arith.constant 0 : i32
    %c0_i32_1 = arith.constant 0 : i32
    return %c0_i32, %c0_i32_0 : i32, i32
  }
  func.func @transform_4(%arg0: i32) -> (i32, i32, i32) {
    %c0_i32 = arith.constant 0 : i32
    %c0_i32_0 = arith.constant 0 : i32
    %c0_i32_1 = arith.constant 0 : i32
    return %arg0, %c0_i32, %c0_i32_0 : i32, i32, i32
  }
}

</mosaic_0001>

<llo_original>
// kernel: mse_forward.1
$region0: #{mse_forward.1}
  #allocation0 [shape = 'u32[]', space=smem, size = 0x4, offset = 0x4, fixed_abs, tag = 'smem constant byte address 0x4 - core index']
  #allocation1 [shape = 'u32[144,128]{1,0:T(1,128)}', space=vmem, size = 0x12000, scoped, tag = 'internal scratch']
  %s0 = inlined_call_operand.vmem [shape: f32[2,4,288], index: 0, kind: input, shape index: {}]
  %s1 = inlined_call_operand.vmem [shape: f32[8,12], index: 1, kind: input, shape index: {}]
  %s2 = inlined_call_operand.vmem [shape: f32[8,1], index: 2, kind: input, shape index: {}]
  %s3 = inlined_call_operand.vmem [shape: f32[8,1], index: 3, kind: input, shape index: {}]
  %s4 = inlined_call_operand.vmem [shape: f32[2,8,256], index: 4, kind: output, shape index: {}]
  %s5 = sld [smem:[#allocation0]]
  $region49: #{mse_forward.1} parent=0
    _
  %s7 = ssub.s32 1, %s5
  %s8 = scalar_select 0, %s7, %s5
  loop: start=0, step=1, limit=4
  $region2: #{mse_forward.1} parent=0 // loop_pre_header
    _
  $region3: #{mse_forward.1} parent=0 // loop_header
    %s10 = sphi 0, %s14
    %p11 = scmp.ge.s32.totalorder %s10, 4
    %s20 = sphi 0, %s22
    %s23 = sphi 0, %s20
    %s24 = sphi 0, %s23
    %s40 = sphi 0, %s24
    %s44 = sphi 0, %s44
    %s46 = sphi 0, %s44
    %s47 = sphi 0, %s46
    %s61 = sphi 0, %s47
    %s65 = sphi 0, %s65
    %s67 = sphi 0, %s65
    %s68 = sphi 0, %s67
    %s82 = sphi 0, %s68
    %s86 = sphi 0, %s86
    %s88 = sphi 0, %s86
    %s89 = sphi 0, %s88
    %s103 = sphi 0, %s89
    %s109 = sphi 0, %s111
    %s112 = sphi 0, %s109
    %s113 = sphi 0, %s112
    %s129 = sphi 0, %s113
  $region4: #{mse_forward.1} parent=0 // loop_header_branch
    %13 = sbr.rel (%p11) target = $region8
  $region5: #{mse_forward.1} parent=0 // loop_body
    %s15 = ssub.s32 %s10, 1
    %s16 = ssub.s32 %s10, 2
    %s17 = sadd.s32 %s10, 1
    %s18 = ssub.s32 %s10, %s17
    %p19 = scmp.eq.s32.totalorder %s18, 0
    %s21 = sadd.s32 %s20, 1
    %s22 = scalar_select %p19, %s20, %s21
    %p25 = pneg %p19
    %p26 = scmp.eq.s32.totalorder %s10, 1
    %p27 = por %p25, %p26
    %p28 = scmp.ne.s32.totalorder %s20, %s23
    %p29 = scmp.eq.s32.totalorder %s10, 0
    %p30 = por %p28, %p29
    %p31 = scmp.ne.s32.totalorder %s20, %s23
    %p32 = scmp.eq.s32.totalorder %s15, 1
    %p33 = por %p31, %p32
    %p34 = scmp.ne.s32.totalorder %s23, %s24
    %p35 = scmp.eq.s32.totalorder %s15, 0
    %p36 = por %p34, %p35
    %p37 = scmp.ne.s32.totalorder %s23, %s24
    %p38 = scmp.eq.s32.totalorder %s16, 1
    %p39 = por %p37, %p38
    %p41 = scmp.ne.s32.totalorder %s24, %s40
    %p42 = scmp.eq.s32.totalorder %s16, 0
    %p43 = por %p41, %p42
    %s45 = sadd.s32 %s44, 1
    %p48 = scmp.eq.s32.totalorder %s10, 1
    %p49 = scmp.ne.s32.totalorder %s44, %s46
    %p50 = scmp.eq.s32.totalorder %s10, 0
    %p51 = por %p49, %p50
    %p52 = scmp.ne.s32.totalorder %s44, %s46
    %p53 = scmp.eq.s32.totalorder %s15, 1
    %p54 = por %p52, %p53
    %p55 = scmp.ne.s32.totalorder %s46, %s47
    %p56 = scmp.eq.s32.totalorder %s15, 0
    %p57 = por %p55, %p56
    %p58 = scmp.ne.s32.totalorder %s46, %s47
    %p59 = scmp.eq.s32.totalorder %s16, 1
    %p60 = por %p58, %p59
    %p62 = scmp.ne.s32.totalorder %s47, %s61
    %p63 = scmp.eq.s32.totalorder %s16, 0
    %p64 = por %p62, %p63
    %s66 = sadd.s32 %s65, 1
    %p69 = scmp.eq.s32.totalorder %s10, 1
    %p70 = scmp.ne.s32.totalorder %s65, %s67
    %p71 = scmp.eq.s32.totalorder %s10, 0
    %p72 = por %p70, %p71
    %p73 = scmp.ne.s32.totalorder %s65, %s67
    %p74 = scmp.eq.s32.totalorder %s15, 1
    %p75 = por %p73, %p74
    %p76 = scmp.ne.s32.totalorder %s67, %s68
    %p77 = scmp.eq.s32.totalorder %s15, 0
    %p78 = por %p76, %p77
    %p79 = scmp.ne.s32.totalorder %s67, %s68
    %p80 = scmp.eq.s32.totalorder %s16, 1
    %p81 = por %p79, %p80
    %p83 = scmp.ne.s32.totalorder %s68, %s82
    %p84 = scmp.eq.s32.totalorder %s16, 0
    %p85 = por %p83, %p84
    %s87 = sadd.s32 %s86, 1
    %p90 = scmp.eq.s32.totalorder %s10, 1
    %p91 = scmp.ne.s32.totalorder %s86, %s88
    %p92 = scmp.eq.s32.totalorder %s10, 0
    %p93 = por %p91, %p92
    %p94 = scmp.ne.s32.totalorder %s86, %s88
    %p95 = scmp.eq.s32.totalorder %s15, 1
    %p96 = por %p94, %p95
    %p97 = scmp.ne.s32.totalorder %s88, %s89
    %p98 = scmp.eq.s32.totalorder %s15, 0
    %p99 = por %p97, %p98
    %p100 = scmp.ne.s32.totalorder %s88, %s89
    %p101 = scmp.eq.s32.totalorder %s16, 1
    %p102 = por %p100, %p101
    %p104 = scmp.ne.s32.totalorder %s89, %s103
    %p105 = scmp.eq.s32.totalorder %s16, 0
    %p106 = por %p104, %p105
    %s107 = ssub.s32 %s10, %s17
    %p108 = scmp.eq.s32.totalorder %s107, 0
    %s110 = sadd.s32 %s109, 1
    %s111 = scalar_select %p108, %s109, %s110
    %p114 = pneg %p108
    %p115 = scmp.eq.s32.totalorder %s10, 1
    %p116 = por %p114, %p115
    %p117 = scmp.ne.s32.totalorder %s109, %s112
    %p118 = scmp.eq.s32.totalorder %s10, 0
    %p119 = por %p117, %p118
    %p120 = scmp.ne.s32.totalorder %s109, %s112
    %p121 = scmp.eq.s32.totalorder %s15, 1
    %p122 = por %p120, %p121
    %p123 = scmp.ne.s32.totalorder %s112, %s113
    %p124 = scmp.eq.s32.totalorder %s15, 0
    %p125 = por %p123, %p124
    %p126 = scmp.ne.s32.totalorder %s112, %s113
    %p127 = scmp.eq.s32.totalorder %s16, 1
    %p128 = por %p126, %p127
    %p130 = scmp.ne.s32.totalorder %s113, %s129
    %p131 = scmp.eq.s32.totalorder %s16, 0
    %p132 = por %p130, %p131
    %p133 = scmp.le.s32.totalorder 1, %s10
    %p134 = scmp.lt.s32.totalorder %s10, 3
    %p135 = pnand %p133, %p134
    %p136 = pneg %p135
    // Predicated region
    $region9: #{mse_forward.1} parent=5 // pred_check
      _
    $region10: #{mse_forward.1} parent=5 // pred_check_branch
      %138 = sbr.rel (%p135) target = $region12
    $region11: #{mse_forward.1} parent=5 // pred_region
      %s139 = ssub.s32 %s10, 1
      // Predicated region
      $region13: #{mse_forward.1} parent=11 // pred_check
        %p140 = pneg %p57
      $region14: #{mse_forward.1} parent=11 // pred_check_branch
        %142 = sbr.rel (%p140) target = $region16
      $region15: #{mse_forward.1} parent=11 // pred_region
        _
      $region16: #{mse_forward.1} parent=11 // pred_fallthru
        _
      // Predicated region
      $region17: #{mse_forward.1} parent=11 // pred_check
        %p143 = pneg %p78
      $region18: #{mse_forward.1} parent=11 // pred_check_branch
        %145 = sbr.rel (%p143) target = $region20
      $region19: #{mse_forward.1} parent=11 // pred_region
        _
      $region20: #{mse_forward.1} parent=11 // pred_fallthru
        _
      // Predicated region
      $region21: #{mse_forward.1} parent=11 // pred_check
        %p146 = pneg %p99
      $region22: #{mse_forward.1} parent=11 // pred_check_branch
        %148 = sbr.rel (%p146) target = $region24
      $region23: #{mse_forward.1} parent=11 // pred_region
        _
      $region24: #{mse_forward.1} parent=11 // pred_fallthru
        _
    $region12: #{mse_forward.1} parent=5 // pred_fallthru
      _
    %p149 = scmp.lt.s32.totalorder %s10, 2
    // Predicated region
    $region25: #{mse_forward.1} parent=5 // pred_check
      %p150 = pneg %p149
    $region26: #{mse_forward.1} parent=5 // pred_check_branch
      %152 = sbr.rel (%p150) target = $region28
    $region27: #{mse_forward.1} parent=5 // pred_region
      // Predicated region
      $region29: #{mse_forward.1} parent=27 // pred_check
        %p153 = pneg %p30
      $region30: #{mse_forward.1} parent=27 // pred_check_branch
        %155 = sbr.rel (%p153) target = $region32
      $region31: #{mse_forward.1} parent=27 // pred_region
        %p156 = scmp.lt.s32.totalorder %s10, 1
        %s157 = scalar_select %p156, %s10, 1
        %s158 = smul.addr %s157, 3
        %s159 = smul.addr %s158, 4
        %s160 = scalar_lea.vmem %s0, %s159
      $region32: #{mse_forward.1} parent=27 // pred_fallthru
        _
    $region28: #{mse_forward.1} parent=5 // pred_fallthru
      _
    %p161 = scmp.le.s32.totalorder 1, %s10
    %p162 = scmp.lt.s32.totalorder %s10, 3
    %p163 = pnand %p161, %p162
    %p164 = pneg %p163
    // Predicated region
    $region33: #{mse_forward.1} parent=5 // pred_check
      _
    $region34: #{mse_forward.1} parent=5 // pred_check_branch
      %166 = sbr.rel (%p163) target = $region36
    $region35: #{mse_forward.1} parent=5 // pred_region
      %s167 = ssub.s32 %s10, 1
      %p168 = scmp.lt.s32.totalorder %s15, 1
      %s169 = scalar_select %p168, %s15, 1
      %s170 = smul.addr %s169, 3
      %s171 = smul.addr %s170, 4
      %s172 = scalar_lea.vmem %s0, %s171
      %p173 = pneg %p36
      %p174 = pneg %p33
      %p175 = pneg %p57
      %p176 = pneg %p54
      %p177 = pneg %p78
      %p178 = pneg %p75
      %p179 = pneg %p99
      %p180 = pneg %p96
      %p181 = pneg %p125
      %p182 = pneg %p122
      %p183 = scmp.lt.s32.totalorder %s15, 1
      %s184 = scalar_select %p183, %s15, 1
      %s185 = smul.addr %s184, 2
      %s186 = smul.addr %s185, 8
      %s187 = scalar_lea.vmem %s4, %s186
      %p188 = scmp.lt.s32.totalorder %s15, 1
      %s189 = scalar_select %p188, %s15, 1
      %s190 = smul.addr %s189, 3
      %s191 = smul.addr %s190, 4
      %s192 = scalar_lea.vmem %s0, %s191
      %p193 = scmp.lt.s32.totalorder %s15, 1
      %s194 = scalar_select %p193, %s15, 1
      %s195 = smul.addr %s194, 2
      %s196 = smul.addr %s195, 8
      %s197 = scalar_lea.vmem %s4, %s196
      %v198 = vld [vmem:[%s192] sm:$0xff]
      %v199 = vld [vmem:[%s192 + $0x8] sm:$0xf]
      %v200 = vld [vmem:[%s1] sm:$0xff]
      %202 = vset.pattern.permute.xlu0 0
      %203 = vperm.xlu0 %202, %v200
      %v204 = vpop.permute.xlu0 %203
      %v207 = vlaneseq
      %v208 = vshrl.u32 %v207, 7
      %v209 = vsub.s32 0, %v208
      %v210 = vrot.slane %v198, %v209
      %v211 = vlaneseq
      %v212 = vshrl.u32 %v211, 7
      %v213 = vsub.s32 4, %v212
      %v214 = vrot.slane %v198, %v213
      %v217 = vlaneseq
      %v218 = vshrl.u32 %v217, 7
      %v219 = vsub.s32 0, %v218
      %v220 = vrot.slane %v210, %v219
      %v221 = vlaneseq
      %v222 = vshrl.u32 %v221, 7
      %v223 = vsub.s32 0, %v222
      %v224 = vrot.slane %v214, %v223
      %v225 = vmul.f32 %v204, %v220
      %v226 = vmul.f32 %v204, %v224
      %v227 = vadd.f32 %v225, 0.0
      %v228 = vadd.f32 %v226, 0.0
      %229 = vset.pattern.permute.xlu0 1
      %230 = vperm.xlu0 %229, %v200
      %v231 = vpop.permute.xlu0 %230
      %v233 = vlaneseq
      %v234 = vshrl.u32 %v233, 7
      %v235 = vsub.s32 1, %v234
      %v236 = vrot.slane %v198, %v235
      %v237 = vlaneseq
      %v238 = vshrl.u32 %v237, 7
      %v239 = vsub.s32 5, %v238
      %v240 = vrot.slane %v198, %v239
      %v243 = vlaneseq
      %v244 = vshrl.u32 %v243, 7
      %v245 = vsub.s32 1, %v244
      %v246 = vrot.slane %v236, %v245
      %v247 = vlaneseq
      %v248 = vshrl.u32 %v247, 7
      %v249 = vsub.s32 1, %v248
      %v250 = vrot.slane %v240, %v249
      %v251 = vmul.f32 %v231, %v246
      %v252 = vmul.f32 %v231, %v250
      %v253 = vadd.f32 %v227, %v251
      %v254 = vadd.f32 %v228, %v252
      %255 = vset.pattern.permute.xlu0 2
      %256 = vperm.xlu0 %255, %v200
      %v257 = vpop.permute.xlu0 %256
      %v259 = vlaneseq
      %v260 = vshrl.u32 %v259, 7
      %v261 = vsub.s32 2, %v260
      %v262 = vrot.slane %v198, %v261
      %v263 = vlaneseq
      %v264 = vshrl.u32 %v263, 7
      %v265 = vsub.s32 6, %v264
      %v266 = vrot.slane %v198, %v265
      %v269 = vlaneseq
      %v270 = vshrl.u32 %v269, 7
      %v271 = vsub.s32 2, %v270
      %v272 = vrot.slane %v262, %v271
      %v273 = vlaneseq
      %v274 = vshrl.u32 %v273, 7
      %v275 = vsub.s32 2, %v274
      %v276 = vrot.slane %v266, %v275
      %v277 = vmul.f32 %v257, %v272
      %v278 = vmul.f32 %v257, %v276
      %v279 = vadd.f32 %v253, %v277
      %v280 = vadd.f32 %v254, %v278
      %281 = vset.pattern.permute.xlu0 3
      %282 = vperm.xlu0 %281, %v200
      %v283 = vpop.permute.xlu0 %282
      %v285 = vlaneseq
      %v286 = vshrl.u32 %v285, 7
      %v287 = vsub.s32 3, %v286
      %v288 = vrot.slane %v198, %v287
      %v289 = vlaneseq
      %v290 = vshrl.u32 %v289, 7
      %v291 = vsub.s32 7, %v290
      %v292 = vrot.slane %v198, %v291
      %v295 = vlaneseq
      %v296 = vshrl.u32 %v295, 7
      %v297 = vsub.s32 3, %v296
      %v298 = vrot.slane %v288, %v297
      %v299 = vlaneseq
      %v300 = vshrl.u32 %v299, 7
      %v301 = vsub.s32 3, %v300
      %v302 = vrot.slane %v292, %v301
      %v303 = vmul.f32 %v283, %v298
      %v304 = vmul.f32 %v283, %v302
      %v305 = vadd.f32 %v279, %v303
      %v306 = vadd.f32 %v280, %v304
      %307 = vset.pattern.permute.xlu0 4
      %308 = vperm.xlu0 %307, %v200
      %v309 = vpop.permute.xlu0 %308
      %v312 = vlaneseq
      %v313 = vshrl.u32 %v312, 7
      %v314 = vsub.s32 0, %v313
      %v315 = vrot.slane %v199, %v314
      %v317 = vlaneseq
      %v318 = vshrl.u32 %v317, 7
      %v319 = vsub.s32 0, %v318
      %v320 = vrot.slane %v315, %v319
      %v321 = vmul.f32 %v309, %v220
      %v322 = vmul.f32 %v309, %v224
      %v323 = vmul.f32 %v309, %v320
      %327 = vrot.lane.b32.xlu0 %v321, 112
      %v328 = vpop.permute.xlu0 %327
      %329 = vrot.lane.b32.xlu0 %v322, 112
      %v330 = vpop.permute.xlu0 %329
      %331 = vrot.lane.b32.xlu0 %v323, 112
      %v332 = vpop.permute.xlu0 %331
      %vm333 = vcmask 916480
      %v334 = vsel %vm333, %v328, %v330
      %v335 = vsel %vm333, %v330, %v332
      %v338 = vadd.f32 %v305, %v334
      %v339 = vadd.f32 %v306, %v335
      %340 = vset.pattern.permute.xlu0 5
      %341 = vperm.xlu0 %340, %v200
      %v342 = vpop.permute.xlu0 %341
      %v344 = vlaneseq
      %v345 = vshrl.u32 %v344, 7
      %v346 = vsub.s32 1, %v345
      %v347 = vrot.slane %v199, %v346
      %v349 = vlaneseq
      %v350 = vshrl.u32 %v349, 7
      %v351 = vsub.s32 1, %v350
      %v352 = vrot.slane %v347, %v351
      %v353 = vmul.f32 %v342, %v246
      %v354 = vmul.f32 %v342, %v250
      %v355 = vmul.f32 %v342, %v352
      %359 = vrot.lane.b32.xlu0 %v353, 112
      %v360 = vpop.permute.xlu0 %359
      %361 = vrot.lane.b32.xlu0 %v354, 112
      %v362 = vpop.permute.xlu0 %361
      %363 = vrot.lane.b32.xlu0 %v355, 112
      %v364 = vpop.permute.xlu0 %363
      %v365 = vsel %vm333, %v360, %v362
      %v366 = vsel %vm333, %v362, %v364
      %v369 = vadd.f32 %v338, %v365
      %v370 = vadd.f32 %v339, %v366
      %371 = vset.pattern.permute.xlu0 6
      %372 = vperm.xlu0 %371, %v200
      %v373 = vpop.permute.xlu0 %372
      %v375 = vlaneseq
      %v376 = vshrl.u32 %v375, 7
      %v377 = vsub.s32 2, %v376
      %v378 = vrot.slane %v199, %v377
      %v380 = vlaneseq
      %v381 = vshrl.u32 %v380, 7
      %v382 = vsub.s32 2, %v381
      %v383 = vrot.slane %v378, %v382
      %v384 = vmul.f32 %v373, %v272
      %v385 = vmul.f32 %v373, %v276
      %v386 = vmul.f32 %v373, %v383
      %390 = vrot.lane.b32.xlu0 %v384, 112
      %v391 = vpop.permute.xlu0 %390
      %392 = vrot.lane.b32.xlu0 %v385, 112
      %v393 = vpop.permute.xlu0 %392
      %394 = vrot.lane.b32.xlu0 %v386, 112
      %v395 = vpop.permute.xlu0 %394
      %v396 = vsel %vm333, %v391, %v393
      %v397 = vsel %vm333, %v393, %v395
      %v400 = vadd.f32 %v369, %v396
      %v401 = vadd.f32 %v370, %v397
      %402 = vset.pattern.permute.xlu0 7
      %403 = vperm.xlu0 %402, %v200
      %v404 = vpop.permute.xlu0 %403
      %v406 = vlaneseq
      %v407 = vshrl.u32 %v406, 7
      %v408 = vsub.s32 3, %v407
      %v409 = vrot.slane %v199, %v408
      %v411 = vlaneseq
      %v412 = vshrl.u32 %v411, 7
      %v413 = vsub.s32 3, %v412
      %v414 = vrot.slane %v409, %v413
      %v415 = vmul.f32 %v404, %v298
      %v416 = vmul.f32 %v404, %v302
      %v417 = vmul.f32 %v404, %v414
      %421 = vrot.lane.b32.xlu0 %v415, 112
      %v422 = vpop.permute.xlu0 %421
      %423 = vrot.lane.b32.xlu0 %v416, 112
      %v424 = vpop.permute.xlu0 %423
      %425 = vrot.lane.b32.xlu0 %v417, 112
      %v426 = vpop.permute.xlu0 %425
      %v427 = vsel %vm333, %v422, %v424
      %v428 = vsel %vm333, %v424, %v426
      %v431 = vadd.f32 %v400, %v427
      %v432 = vadd.f32 %v401, %v428
      %433 = vset.pattern.permute.xlu0 8
      %434 = vperm.xlu0 %433, %v200
      %v435 = vpop.permute.xlu0 %434
      %v437 = vmul.f32 %v435, %v220
      %v438 = vmul.f32 %v435, %v224
      %v439 = vmul.f32 %v435, %v320
      %443 = vrot.lane.b32.xlu0 %v437, 96
      %v444 = vpop.permute.xlu0 %443
      %445 = vrot.lane.b32.xlu0 %v438, 96
      %v446 = vpop.permute.xlu0 %445
      %447 = vrot.lane.b32.xlu0 %v439, 96
      %v448 = vpop.permute.xlu0 %447
      %vm449 = vcmask 785408
      %v450 = vsel %vm449, %v444, %v446
      %v451 = vsel %vm449, %v446, %v448
      %v454 = vadd.f32 %v431, %v450
      %v455 = vadd.f32 %v432, %v451
      %456 = vset.pattern.permute.xlu0 9
      %457 = vperm.xlu0 %456, %v200
      %v458 = vpop.permute.xlu0 %457
      %v460 = vmul.f32 %v458, %v246
      %v461 = vmul.f32 %v458, %v250
      %v462 = vmul.f32 %v458, %v352
      %466 = vrot.lane.b32.xlu0 %v460, 96
      %v467 = vpop.permute.xlu0 %466
      %468 = vrot.lane.b32.xlu0 %v461, 96
      %v469 = vpop.permute.xlu0 %468
      %470 = vrot.lane.b32.xlu0 %v462, 96
      %v471 = vpop.permute.xlu0 %470
      %v472 = vsel %vm449, %v467, %v469
      %v473 = vsel %vm449, %v469, %v471
      %v476 = vadd.f32 %v454, %v472
      %v477 = vadd.f32 %v455, %v473
      %478 = vset.pattern.permute.xlu0 10
      %479 = vperm.xlu0 %478, %v200
      %v480 = vpop.permute.xlu0 %479
      %v482 = vmul.f32 %v480, %v272
      %v483 = vmul.f32 %v480, %v276
      %v484 = vmul.f32 %v480, %v383
      %488 = vrot.lane.b32.xlu0 %v482, 96
      %v489 = vpop.permute.xlu0 %488
      %490 = vrot.lane.b32.xlu0 %v483, 96
      %v491 = vpop.permute.xlu0 %490
      %492 = vrot.lane.b32.xlu0 %v484, 96
      %v493 = vpop.permute.xlu0 %492
      %v494 = vsel %vm449, %v489, %v491
      %v495 = vsel %vm449, %v491, %v493
      %v498 = vadd.f32 %v476, %v494
      %v499 = vadd.f32 %v477, %v495
      %500 = vset.pattern.permute.xlu0 11
      %501 = vperm.xlu0 %500, %v200
      %v502 = vpop.permute.xlu0 %501
      %v504 = vmul.f32 %v502, %v298
      %v505 = vmul.f32 %v502, %v302
      %v506 = vmul.f32 %v502, %v414
      %510 = vrot.lane.b32.xlu0 %v504, 96
      %v511 = vpop.permute.xlu0 %510
      %512 = vrot.lane.b32.xlu0 %v505, 96
      %v513 = vpop.permute.xlu0 %512
      %514 = vrot.lane.b32.xlu0 %v506, 96
      %v515 = vpop.permute.xlu0 %514
      %v516 = vsel %vm449, %v511, %v513
      %v517 = vsel %vm449, %v513, %v515
      %v520 = vadd.f32 %v498, %v516
      %v521 = vadd.f32 %v499, %v517
      %v522 = vld [vmem:[%s2] sm:$0xff]
      %524 = vset.pattern.permute.xlu0 0
      %525 = vperm.xlu0 %524, %v522
      %v526 = vpop.permute.xlu0 %525
      %v528 = vmul.f32 %v520, %v526
      %v529 = vmul.f32 %v521, %v526
      %v530 = vld [vmem:[%s3] sm:$0xff]
      %532 = vset.pattern.permute.xlu0 0
      %533 = vperm.xlu0 %532, %v530
      %v534 = vpop.permute.xlu0 %533
      %v536 = vadd.f32 %v528, %v534
      %v537 = vadd.f32 %v529, %v534
      %v538 = vmax.f32 %v536, 0.0
      %v539 = vmax.f32 %v537, 0.0
      %540 = vst [vmem:[%s197] sm:$0xff] %v538
      %541 = vst [vmem:[%s197 + $0x8] sm:$0xff] %v539
      %p542 = scmp.lt.s32.totalorder %s15, 1
      %s543 = scalar_select %p542, %s15, 1
      %s544 = smul.addr %s543, 2
      %s545 = smul.addr %s544, 8
      %s546 = scalar_lea.vmem %s4, %s545
      // Predicated region
      $region37: #{mse_forward.1} parent=35 // pred_check
        %p547 = pneg %p122
      $region38: #{mse_forward.1} parent=35 // pred_check_branch
        %549 = sbr.rel (%p547) target = $region40
      $region39: #{mse_forward.1} parent=35 // pred_region
        _
      $region40: #{mse_forward.1} parent=35 // pred_fallthru
        _
    $region36: #{mse_forward.1} parent=5 // pred_fallthru
      _
    %p550 = scmp.le.s32.totalorder 2, %s10
    // Predicated region
    $region41: #{mse_forward.1} parent=5 // pred_check
      %p551 = pneg %p550
    $region42: #{mse_forward.1} parent=5 // pred_check_branch
      %553 = sbr.rel (%p551) target = $region44
    $region43: #{mse_forward.1} parent=5 // pred_region
      %s554 = ssub.s32 %s10, 2
      // Predicated region
      $region45: #{mse_forward.1} parent=43 // pred_check
        %p555 = pneg %p128
      $region46: #{mse_forward.1} parent=43 // pred_check_branch
        %557 = sbr.rel (%p555) target = $region48
      $region47: #{mse_forward.1} parent=43 // pred_region
        %p558 = scmp.lt.s32.totalorder %s16, 1
        %s559 = scalar_select %p558, %s16, 1
        %s560 = smul.addr %s559, 2
        %s561 = smul.addr %s560, 8
        %s562 = scalar_lea.vmem %s4, %s561
      $region48: #{mse_forward.1} parent=43 // pred_fallthru
        _
    $region44: #{mse_forward.1} parent=5 // pred_fallthru
      _
  $region6: #{mse_forward.1} parent=0 // loop_footer
    %s14 = sadd.s32 1, %s10
  $region7: #{mse_forward.1} parent=0 // loop_footer_branch
    %9 = sbr.rel target = $region3
  $region8: #{mse_forward.1} parent=0 // loop_exit
    _

</llo_original>
